<compile_context>
chip_gen: v6e
topology: v6e:2x2x1
jax: 0.10.0
libtpu: 0.0.40
codegen_flags: <defaults>
</compile_context>

<pallas_src>
import functools

import jax
import jax.numpy as jnp
from jax.experimental import pallas as pl
from jax.experimental.pallas import tpu as pltpu


def _attention_kernel(x_ref, w1t_ref, b1_ref, w2_ref, out_ref, *, s_valid):
    # x_ref:   (TB, S_pad, H)  block of TB batch elements
    # w1t_ref: (H, K)          W1.weight transposed (K = 16), replicated
    # b1_ref:  (1, K)
    # w2_ref:  (1, K)          w2.weight row vector
    # out_ref: (TB, PW)        packed lane-dense output slab:
    #                          lanes [0, H)      -> context vector
    #                          lanes [H, H+S_pad)-> attention weights
    tb, s_pad, h = x_ref.shape
    k = w1t_ref.shape[1]
    pw = out_ref.shape[1]

    x3 = x_ref[...]                                   # (TB, S_pad, H)
    x2 = x3.reshape(tb * s_pad, h)                    # layout-free (S_pad % 8 == 0)

    # One fused MXU matmul for all TB*S_pad rows: tanh(x @ W1^T + b1)
    hid = jnp.tanh(
        jnp.dot(x2, w1t_ref[...], preferred_element_type=jnp.float32) + b1_ref[...]
    )
    h3 = hid.reshape(tb, s_pad, k)                    # (TB, S_pad, K)

    # logits (TB, S_pad): lane reduction over K.  b2 dropped (softmax-invariant).
    logits = jnp.sum(h3 * w2_ref[...].reshape(1, 1, k), axis=-1)

    if s_valid < s_pad:
        # Padded sequence positions (added only to keep reshapes layout-free)
        # must not participate in the softmax.
        lane = jax.lax.broadcasted_iota(jnp.int32, (tb, s_pad), 1)
        logits = jnp.where(lane < s_valid, logits, -jnp.inf)

    # numerically stable softmax over the sequence (lane) axis
    m = jnp.max(logits, axis=-1, keepdims=True)                  # (TB, 1)
    e = jnp.exp(logits - m)                                      # (TB, S_pad)
    denom = jnp.sum(e, axis=-1, keepdims=True)                   # (TB, 1)
    alpha = e * pl.reciprocal(denom, approx=False)               # (TB, S_pad)

    # context[b, :] = sum_s alpha[b, s] * x[b, s, :]   -> (TB, H)
    ctx = jnp.sum(alpha.reshape(tb, s_pad, 1) * x3, axis=1)

    # Pack into one lane-dense slab -> single unmasked full-width store.
    pieces = [ctx, alpha]
    pad_lanes = pw - (h + s_pad)
    if pad_lanes > 0:
        pieces.append(jnp.zeros((tb, pad_lanes), jnp.float32))
    out_ref[...] = jnp.concatenate(pieces, axis=-1)

    # TODO(synk): `dynamic=True` length masking (zeroing logits past
    # dynamic_length[b] before softmax) is not implemented here.


def attention_forward(x, w1, b1, w2, b2=None, *, block_batch=None):
    """x: (B, S, H); w1: (16, H); b1: (16,); w2: (1, 16); b2: (1,) (unused)."""
    del b2  # softmax(logits + c) == softmax(logits) for a scalar c
    B, S, H = x.shape
    K = w1.shape[0]  # 16

    w1t = jnp.transpose(w1)          # (H, K)
    b1r = b1.reshape(1, K)           # (1, K)
    w2r = w2.reshape(1, K)           # (1, K)

    # Pad S to a multiple of 8 (f32 sublane) so in-kernel reshapes are
    # layout-free; padded positions are masked inside the kernel.
    S_pad = ((S + 7) // 8) * 8
    if S_pad != S:
        x = jnp.pad(x, ((0, 0), (0, S_pad - S), (0, 0)))

    # Generation-aware budgets (conservative v7x defaults if query fails).
    try:
        info = pltpu.get_tpu_info()
        vmem_cap = int(getattr(info, "vmem_capacity_bytes", 64 * 1024 * 1024))
    except Exception:  # pragma: no cover - fallback for any query failure
        vmem_cap = 64 * 1024 * 1024

    if vmem_cap > 96 * 1024 * 1024:
        # v5e / v6e: 128 MiB physical VMEM -> bigger blocks amortize per-step cost.
        target_rows = 512
        x_buf_budget = 40 * 1024 * 1024
        vmem_ceiling = 96 * 1024 * 1024
    else:
        # v7x: 64 MiB physical per TensorCore -> leave headroom for the compiler.
        target_rows = 256
        x_buf_budget = 12 * 1024 * 1024
        vmem_ceiling = 48 * 1024 * 1024

    if block_batch is None:
        tb = max(1, target_rows // max(S_pad, 1))
        max_tb_vmem = max(1, x_buf_budget // (2 * 4 * max(S_pad * H, 1)))
        tb = min(tb, max_tb_vmem)
    else:
        tb = block_batch

    # Keep >= 2 grid steps for large batches so both v7x TensorCores get work
    # on the "parallel" batch axis (also shortens per-core VMEM residency).
    if B >= 16:
        half_round8 = (((B + 1) // 2) + 7) // 8 * 8
        tb = min(tb, half_round8)

    if tb >= B:
        tb = B                            # tiny problem: whole batch, one step
    else:
        tb = max(8, (tb // 8) * 8)        # sublane-aligned output blocks

    B_pad = pl.cdiv(B, tb) * tb
    if B_pad != B:
        x = jnp.pad(x, ((0, B_pad - B), (0, 0), (0, 0)))

    grid = (B_pad // tb,)

    # Packed output slab width: multiple of 128 lanes (ctx then alpha).
    PW = ((H + S_pad + 127) // 128) * 128

    # Explicit VMEM budget with headroom (never the full physical VMEM).
    block_bytes = 4 * (tb * S_pad * H + H * K + 2 * K + tb * PW)
    vmem_limit = int(min(vmem_ceiling, max(32 * 1024 * 1024, 4 * block_bytes)))

    grid_spec = pltpu.PrefetchScalarGridSpec(
        num_scalar_prefetch=0,
        grid=grid,
        in_specs=[
            pl.BlockSpec((tb, S_pad, H), lambda b: (b, 0, 0)),   # x block
            pl.BlockSpec((H, K), lambda b: (0, 0)),              # W1^T (replicated)
            pl.BlockSpec((1, K), lambda b: (0, 0)),              # b1
            pl.BlockSpec((1, K), lambda b: (0, 0)),              # w2
        ],
        out_specs=pl.BlockSpec((tb, PW), lambda b: (b, 0)),      # packed ctx|alpha
    )

    kernel = functools.partial(_attention_kernel, s_valid=S)

    packed = pl.pallas_call(
        kernel,
        grid_spec=grid_spec,
        out_shape=jax.ShapeDtypeStruct((B_pad, PW), jnp.float32),
        compiler_params=pltpu.CompilerParams(
            dimension_semantics=("parallel",),
            vmem_limit_bytes=vmem_limit,
        ),
    )(x, w1t, b1r, w2r)

    ctx = packed[:B, :H]          # (B, H)
    alpha = packed[:B, H:H + S]   # (B, S)
    return ctx, alpha


def attention_reference(x, w1, b1, w2, b2):
    h = jnp.tanh(jnp.einsum("bsh,kh->bsk", x, w1) + b1)          # (B, S, 16)
    logits = jnp.einsum("bsk,ok->bso", h, w2)[..., 0] + b2[0]    # (B, S)
    alpha = jax.nn.softmax(logits, axis=1)
    ctx = jnp.einsum("bs,bsh->bh", alpha, x)
    return ctx, alpha


if __name__ == "__main__":
    B, S, H = 2, 8, 32  # batch, sequence_length, hidden_size

    key = jax.random.PRNGKey(0)
    kx, kw1, kb1, kw2, kb2 = jax.random.split(key, 5)

    x = jax.random.normal(kx, (B, S, H), dtype=jnp.float32)
    # deterministic parameter init (shapes from nn.Linear(hidden, 16) / nn.Linear(16, 1))
    w1 = jax.random.normal(kw1, (16, H), dtype=jnp.float32) * 0.1
    b1 = jax.random.normal(kb1, (16,), dtype=jnp.float32) * 0.1
    w2 = jax.random.normal(kw2, (1, 16), dtype=jnp.float32) * 0.1
    b2 = jax.random.normal(kb2, (1,), dtype=jnp.float32) * 0.1

    ctx, alpha = attention_forward(x, w1, b1, w2, b2)
    jax.block_until_ready((ctx, alpha))

    ctx_ref, alpha_ref = attention_reference(x, w1, b1, w2, b2)
    assert ctx.shape == (B, H) and alpha.shape == (B, S)
    assert jnp.allclose(ctx, ctx_ref, atol=1e-5, rtol=1e-5)
    assert jnp.allclose(alpha, alpha_ref, atol=1e-5, rtol=1e-5)

    print("KERNEL_OK")
</pallas_src>

<mosaic_0001>
module attributes {stable_mosaic.version = 11 : i64} {
  func.func @_attention_kernel(%arg0: i32, %arg1: memref<2x8x32xf32, #tpu.memory_space<vmem>>, %arg2: memref<32x16xf32, #tpu.memory_space<vmem>>, %arg3: memref<1x16xf32, #tpu.memory_space<vmem>>, %arg4: memref<1x16xf32, #tpu.memory_space<vmem>>, %arg5: memref<2x128xf32, #tpu.memory_space<vmem>>) attributes {dimension_semantics = [#tpu.dimension_semantics<parallel>], iteration_bounds = array<i64: 1>, scalar_prefetch = 0 : i64, scratch_operands = 0 : i64, tpu.core_type = #tpu.core_type<tc>, window_params = [{transform_indices = @transform_0, window_bounds = array<i64: 2, 8, 32>}, {pipeline_mode = #tpu.pipeline_mode<synchronous>, transform_indices = @transform_1, window_bounds = array<i64: 32, 16>}, {pipeline_mode = #tpu.pipeline_mode<synchronous>, transform_indices = @transform_2, window_bounds = array<i64: 1, 16>}, {pipeline_mode = #tpu.pipeline_mode<synchronous>, transform_indices = @transform_3, window_bounds = array<i64: 1, 16>}, {transform_indices = @transform_4, window_bounds = array<i64: 2, 128>}]} {
    %c0 = arith.constant 0 : index
    %c0_0 = arith.constant 0 : index
    %c0_1 = arith.constant 0 : index
    %0 = vector.load %arg1[%c0, %c0_0, %c0_1] : memref<2x8x32xf32, #tpu.memory_space<vmem>>, vector<2x8x32xf32>
    %1 = vector.shape_cast %0 : vector<2x8x32xf32> to vector<16x32xf32>
    %c0_2 = arith.constant 0 : index
    %c0_3 = arith.constant 0 : index
    %2 = vector.load %arg2[%c0_2, %c0_3] : memref<32x16xf32, #tpu.memory_space<vmem>>, vector<32x16xf32>
    %cst = arith.constant dense<0.000000e+00> : vector<16x16xf32>
    %3 = tpu.matmul %1, %2, %cst {dimension_numbers = #tpu.dot_dimension_numbers<[1], [0], [0], [1], [0, 0, 1, 1], [], []>} : vector<16x32xf32>, vector<32x16xf32>, vector<16x16xf32> -> vector<16x16xf32>
    %c0_4 = arith.constant 0 : index
    %c0_5 = arith.constant 0 : index
    %4 = vector.load %arg3[%c0_4, %c0_5] : memref<1x16xf32, #tpu.memory_space<vmem>>, vector<1x16xf32>
    %5 = vector.broadcast %4 : vector<1x16xf32> to vector<16x16xf32>
    %6 = arith.addf %3, %5 : vector<16x16xf32>
    %7 = math.tanh %6 : vector<16x16xf32>
    %8 = vector.shape_cast %7 : vector<16x16xf32> to vector<2x8x16xf32>
    %c0_6 = arith.constant 0 : index
    %c0_7 = arith.constant 0 : index
    %9 = vector.load %arg4[%c0_6, %c0_7] : memref<1x16xf32, #tpu.memory_space<vmem>>, vector<1x16xf32>
    %10 = vector.shape_cast %9 : vector<1x16xf32> to vector<1x1x16xf32>
    %11 = vector.broadcast %10 : vector<1x1x16xf32> to vector<2x8x16xf32>
    %12 = arith.mulf %8, %11 : vector<2x8x16xf32>
    %cst_8 = arith.constant dense<0.000000e+00> : vector<2x8xf32>
    %13 = vector.multi_reduction <add>, %12, %cst_8 [2] : vector<2x8x16xf32> to vector<2x8xf32>
    %cst_9 = arith.constant dense<0xFF800000> : vector<2xf32>
    %14 = vector.multi_reduction <maximumf>, %13, %cst_9 [1] : vector<2x8xf32> to vector<2xf32>
    %15 = vector.shape_cast %14 : vector<2xf32> to vector<2x1xf32>
    %16 = vector.broadcast %15 : vector<2x1xf32> to vector<2x8xf32>
    %17 = arith.subf %13, %16 : vector<2x8xf32>
    %18 = math.exp %17 : vector<2x8xf32>
    %cst_10 = arith.constant dense<0.000000e+00> : vector<2xf32>
    %19 = vector.multi_reduction <add>, %18, %cst_10 [1] : vector<2x8xf32> to vector<2xf32>
    %20 = vector.shape_cast %19 : vector<2xf32> to vector<2x1xf32>
    %21 = tpu.reciprocal %20 : vector<2x1xf32> -> vector<2x1xf32>
    %22 = vector.broadcast %21 : vector<2x1xf32> to vector<2x8xf32>
    %23 = arith.mulf %18, %22 : vector<2x8xf32>
    %24 = vector.shape_cast %23 : vector<2x8xf32> to vector<2x8x1xf32>
    %25 = vector.broadcast %24 : vector<2x8x1xf32> to vector<2x8x32xf32>
    %26 = arith.mulf %25, %0 : vector<2x8x32xf32>
    %cst_11 = arith.constant dense<0.000000e+00> : vector<2x32xf32>
    %27 = vector.multi_reduction <add>, %26, %cst_11 [1] : vector<2x8x32xf32> to vector<2x32xf32>
    %cst_12 = arith.constant 0.000000e+00 : f32
    %28 = vector.broadcast %cst_12 : f32 to vector<2x88xf32>
    %29 = tpu.concatenate %27, %23, %28 in 1 : vector<2x32xf32>, vector<2x8xf32>, vector<2x88xf32> -> vector<2x128xf32>
    %c0_13 = arith.constant 0 : index
    %c0_14 = arith.constant 0 : index
    %30 = vector.load %arg5[%c0_13, %c0_14] : memref<2x128xf32, #tpu.memory_space<vmem>>, vector<2x128xf32>
    tpu.vector_store %arg5[%c0_13, %c0_14], %29 {strides = array<i32>} : memref<2x128xf32, #tpu.memory_space<vmem>>, vector<2x128xf32>,
    return
  }
  func.func @transform_0(%arg0: i32) -> (i32, i32, i32) {
    %c0_i32 = arith.constant 0 : i32
    %c0_i32_0 = arith.constant 0 : i32
    %c0_i32_1 = arith.constant 0 : i32
    return %arg0, %c0_i32, %c0_i32_0 : i32, i32, i32
  }
  func.func @transform_1(%arg0: i32) -> (i32, i32) {
    %c0_i32 = arith.constant 0 : i32
    %c0_i32_0 = arith.constant 0 : i32
    %c0_i32_1 = arith.constant 0 : i32
    return %c0_i32, %c0_i32_0 : i32, i32
  }
  func.func @transform_2(%arg0: i32) -> (i32, i32) {
    %c0_i32 = arith.constant 0 : i32
    %c0_i32_0 = arith.constant 0 : i32
    %c0_i32_1 = arith.constant 0 : i32
    return %c0_i32, %c0_i32_0 : i32, i32
  }
  func.func @transform_3(%arg0: i32) -> (i32, i32) {
    %c0_i32 = arith.constant 0 : i32
    %c0_i32_0 = arith.constant 0 : i32
    %c0_i32_1 = arith.constant 0 : i32
    return %c0_i32, %c0_i32_0 : i32, i32
  }
  func.func @transform_4(%arg0: i32) -> (i32, i32) {
    %c0_i32 = arith.constant 0 : i32
    %c0_i32_0 = arith.constant 0 : i32
    return %arg0, %c0_i32 : i32, i32
  }
}

</mosaic_0001>

<llo_original>
// kernel: tpu_custom_call.1
$region0: #{tpu_custom_call.1}
  #allocation0 [shape = 'u32[]', space=smem, size = 0x4, offset = 0x4, fixed_abs, tag = 'smem constant byte address 0x4 - core index']
  #allocation1 [shape = 'u32[144,128]{1,0:T(1,128)}', space=vmem, size = 0x12000, scoped, tag = 'internal scratch']
  %s0 = inlined_call_operand.vmem [shape: f32[2,8,32], index: 0, kind: input, shape index: {}]
  %s1 = inlined_call_operand.vmem [shape: f32[32,16], index: 1, kind: input, shape index: {}]
  %s2 = inlined_call_operand.vmem [shape: f32[1,16], index: 2, kind: input, shape index: {}]
  %s3 = inlined_call_operand.vmem [shape: f32[1,16], index: 3, kind: input, shape index: {}]
  %s4 = inlined_call_operand.hbm [shape: f32[2,128], index: 4, kind: output, shape index: {}]
  %s5 = sld [smem:[#allocation0]]
  $region26: #{tpu_custom_call.1} parent=0
    _
  %s7 = ssub.s32 1, %s5
  %s8 = scalar_select 0, %s7, %s5
  $region1: #{tpu_custom_call.1} parent=0
    #allocation2 [shape = 'u8[1024]{0}', space=vmem, size = 0x400, scoped, tag = 'output window, operand 0, single buffered']
    #allocation3 [shape = 's32[1]{0}', space=sflag, size = 0x4, scoped, tag = 'scoped memory for tpu_custom_call.1']
    %9 = vsyncpa [#allocation3], 0
    // Predicated region
    $region2: #{tpu_custom_call.1} parent=1 // pred_check
      _
    $region3: #{tpu_custom_call.1} parent=1 // pred_check_branch
      %11 = sbr.rel (0) target = $region5
    $region4: #{tpu_custom_call.1} parent=1 // pred_region
      _
    $region5: #{tpu_custom_call.1} parent=1 // pred_fallthru
      _
    // Predicated region
    $region6: #{tpu_custom_call.1} parent=1 // pred_check
      _
    $region7: #{tpu_custom_call.1} parent=1 // pred_check_branch
      %13 = sbr.rel (0) target = $region9
    $region8: #{tpu_custom_call.1} parent=1 // pred_region
      _
    $region9: #{tpu_custom_call.1} parent=1 // pred_fallthru
      _
    // Predicated region
    $region10: #{tpu_custom_call.1} parent=1 // pred_check
      _
    $region11: #{tpu_custom_call.1} parent=1 // pred_check_branch
      %15 = sbr.rel (0) target = $region13
    $region12: #{tpu_custom_call.1} parent=1 // pred_region
      _
    $region13: #{tpu_custom_call.1} parent=1 // pred_fallthru
      _
    // Predicated region
    $region14: #{tpu_custom_call.1} parent=1 // pred_check
      _
    $region15: #{tpu_custom_call.1} parent=1 // pred_check_branch
      %17 = sbr.rel (0) target = $region17
    $region16: #{tpu_custom_call.1} parent=1 // pred_region
      _
    $region17: #{tpu_custom_call.1} parent=1 // pred_fallthru
      _
    %v18 = vld [vmem:[%s0] sm:$0xff]
    %v19 = vld [vmem:[%s0 + $0x8] sm:$0xff]
    %v20 = vld [vmem:[%s1] sm:$0xff]
    %v21 = vld [vmem:[%s1 + $0x8] sm:$0xff]
    %v22 = vld [vmem:[%s1 + $0x10] sm:$0xff]
    %v23 = vld [vmem:[%s1 + $0x18] sm:$0xff]
    %v24 = vld [vmem:[%s2] sm:$0x1]
    %v26 = vlaneseq
    %v27 = vshrl.u32 %v26, 7
    %v28 = vsub.s32 0, %v27
    %v29 = vrot.slane %v24, %v28
    %vm31 = vcmask 261120
    %v33 = vsel %vm31, %v18, 0
    %v36 = vsel %vm31, %v19, 0
    %38 = vmatprep.subr.mxu0 0.0
    %39 = vmatpush1.msra.mxu0 0.0
    %40 = vmatprep.subr.mxu0 0.0
    %41 = vmatpush1.msra.mxu0 0.0
    %42 = vmatprep.subr.mxu0 0.0
    %43 = vmatpush1.msra.mxu0 0.0
    %44 = vmatprep.subr.mxu0 0.0
    %45 = vmatpush1.msra.mxu0 0.0
    %46 = vmatprep.subr.mxu0 0.0
    %47 = vmatpush1.msra.mxu0 0.0
    %48 = vmatprep.subr.mxu0 0.0
    %49 = vmatpush1.msra.mxu0 0.0
    %50 = vmatprep.subr.mxu0 0.0
    %51 = vmatpush1.msra.mxu0 0.0
    %52 = vmatprep.subr.mxu0 0.0
    %53 = vmatpush1.msra.mxu0 0.0
    %54 = vmatprep.subr.mxu0 0.0
    %55 = vmatpush1.msra.mxu0 0.0
    %56 = vmatprep.subr.mxu0 0.0
    %57 = vmatpush1.msra.mxu0 0.0
    %58 = vmatprep.subr.mxu0 0.0
    %59 = vmatpush1.msra.mxu0 0.0
    %60 = vmatprep.subr.mxu0 0.0
    %61 = vmatpush1.msra.mxu0 0.0
    %62 = vmatprep.subr.mxu0 0.0
    %63 = vmatpush1.msra.mxu0 %v23
    %64 = vmatprep.subr.mxu0 0.0
    %65 = vmatpush1.msra.mxu0 %v22
    %66 = vmatprep.subr.mxu0 0.0
    %67 = vmatpush1.msra.mxu0 %v21
    %68 = vmatprep.subr.mxu0 0.0
    %69 = vmatpush1.msra.mxu0 %v20
    %70 = vmatprep.subr.mxu0 0.0
    %71 = vmatpush2.msra.mxu0 0.0
    %72 = vmatprep.subr.mxu0 0.0
    %73 = vmatpush2.msra.mxu0 0.0
    %74 = vmatprep.subr.mxu0 0.0
    %75 = vmatpush2.msra.mxu0 0.0
    %76 = vmatprep.subr.mxu0 0.0
    %77 = vmatpush2.msra.mxu0 0.0
    %78 = vmatprep.subr.mxu0 0.0
    %79 = vmatpush2.msra.mxu0 0.0
    %80 = vmatprep.subr.mxu0 0.0
    %81 = vmatpush2.msra.mxu0 0.0
    %82 = vmatprep.subr.mxu0 0.0
    %83 = vmatpush2.msra.mxu0 0.0
    %84 = vmatprep.subr.mxu0 0.0
    %85 = vmatpush2.msra.mxu0 0.0
    %86 = vmatprep.subr.mxu0 0.0
    %87 = vmatpush2.msra.mxu0 0.0
    %88 = vmatprep.subr.mxu0 0.0
    %89 = vmatpush2.msra.mxu0 0.0
    %90 = vmatprep.subr.mxu0 0.0
    %91 = vmatpush2.msra.mxu0 0.0
    %92 = vmatprep.subr.mxu0 0.0
    %93 = vmatpush2.msra.mxu0 0.0
    %94 = vmatprep.subr.mxu0 0.0
    %95 = vmatpush2.msra.mxu0 0.0
    %96 = vmatprep.subr.mxu0 0.0
    %97 = vmatpush2.msra.mxu0 0.0
    %98 = vmatprep.subr.mxu0 0.0
    %99 = vmatpush2.msra.mxu0 0.0
    %100 = vmatprep.subr.mxu0 0.0
    %101 = vmatpush2.msra.mxu0 0.0
    %102 = vmatprep.mubr.f32.mxu0 0.0
    %103 = vmatmul.mubr.f32.gmra.mxu0 %v33
    %v104 = vpop.f32.mrf.mxu0
    %v105 = vadd.f32 %v29, %v104
    %v106 = vpop.f32.mrf.mxu0
    %107 = vmatprep.mubr.f32.mxu0 0.0
    %108 = vmatmul.mubr.f32.gmra.mxu0 %v36
    %v109 = vpop.f32.mrf.mxu0
    %v110 = vadd.f32 %v29, %v109
    %v111 = vpop.f32.mrf.mxu0
    %112 = vdwg.mxu0
    %v113 = vtanh.pop %v105
    %v114 = vtanh.pop %v110
    %v115 = vld [vmem:[%s3] sm:$0x1]
    %v117 = vlaneseq
    %v118 = vshrl.u32 %v117, 7
    %v119 = vsub.s32 0, %v118
    %v120 = vrot.slane %v115, %v119
    %v122 = vmul.f32 %v113, %v120
    %v123 = vmul.f32 %v114, %v120
    %vm124 = vcmask 130048
    %v125 = vsel %vm124, %v122, 0.0
    %126 = vadd.xlane.f32.xlu0 %v125
    %v127 = vpop.xlane.xlu0 %126
    %v128 = vsel %vm124, %v123, 0.0
    %129 = vadd.xlane.f32.xlu0 %v128
    %v130 = vpop.xlane.xlu0 %129
    %v133 = vlaneseq
    %v134 = vand.u32 %v133, 127
    %v135 = vlaneseq
    %v136 = vshrl.u32 %v135, 7
    %v137 = vsub.s32 %v134, %v136
    %v138 = vrot.slane %v127, %v137
    %v139 = vlaneseq
    %v140 = vshrl.u32 %v139, 7
    %v141 = vsub.s32 %v134, %v140
    %v142 = vrot.slane %v130, %v141
    %vm143 = vcmask 1041409
    %v144 = vsel %vm143, %v142, %v138
    %vm146 = vcmask 58368
    %v147 = vsel %vm146, %v144, -inf
    %148 = vmax.xlane.f32.xlu0 %v147
    %v149 = vpop.xlane.xlu0 %148
    %v151 = vlaneseq
    %v152 = vshrl.u32 %v151, 7
    %v153 = vsub.s32 0, %v152
    %v154 = vrot.slane %v149, %v153
    %v155 = vlaneseq
    %v156 = vshrl.u32 %v155, 7
    %v157 = vsub.s32 1, %v156
    %v158 = vrot.slane %v149, %v157
    %v161 = vsub.f32 %v127, %v154
    %v162 = vsub.f32 %v130, %v158
    %v163 = vmul.f32 %v161, 1.442695
    %v164 = vpow.pop %v163
    %v165 = vmul.f32 %v162, 1.442695
    %v166 = vpow.pop %v165
    %169 = vset.pattern.permute.xlu0 0
    %170 = vperm.xlu0 %169, %v164
    %v171 = vpop.permute.xlu0 %170
    %172 = vset.pattern.permute.xlu0 0
    %173 = vperm.xlu0 %172, %v166
    %v174 = vpop.permute.xlu0 %173
    %v175 = vlaneseq
    %v176 = vshrl.u32 %v175, 7
    %v177 = vsub.s32 %v134, %v176
    %v178 = vrot.slane %v171, %v177
    %v179 = vlaneseq
    %v180 = vshrl.u32 %v179, 7
    %v181 = vsub.s32 %v134, %v180
    %v182 = vrot.slane %v174, %v181
    %v183 = vsel %vm143, %v182, %v178
    %v185 = vsel %vm146, %v183, 0.0
    %186 = vadd.xlane.f32.xlu0 %v185
    %v187 = vpop.xlane.xlu0 %186
    %v188 = vrcp.pop %v187
    %v190 = vlaneseq
    %v191 = vshrl.u32 %v190, 7
    %v192 = vsub.s32 0, %v191
    %v193 = vrot.slane %v188, %v192
    %v194 = vlaneseq
    %v195 = vshrl.u32 %v194, 7
    %v196 = vsub.s32 1, %v195
    %v197 = vrot.slane %v188, %v196
    %v200 = vmul.f32 %v164, %v193
    %v201 = vmul.f32 %v166, %v197
    %203 = vset.pattern.permute.xlu0 0
    %204 = vperm.xlu0 %203, %v200
    %v205 = vpop.permute.xlu0 %204
    %208 = vset.pattern.permute.xlu0 0
    %209 = vperm.xlu0 %208, %v201
    %v210 = vpop.permute.xlu0 %209
    %v212 = vmul.f32 %v205, %v18
    %v213 = vmul.f32 %v210, %v19
    %v214 = vsel %vm31, %v212, 0.0
    %v215 = vrot.slane %v214, 4
    %v216 = vadd.f32 %v214, %v215
    %v217 = vrot.slane %v216, 2
    %v218 = vadd.f32 %v216, %v217
    %v219 = vrot.slane %v218, 1
    %v220 = vadd.f32 %v218, %v219
    %v221 = vsel %vm31, %v213, 0.0
    %v222 = vrot.slane %v221, 4
    %v223 = vadd.f32 %v221, %v222
    %v224 = vrot.slane %v223, 2
    %v225 = vadd.f32 %v223, %v224
    %v226 = vrot.slane %v225, 1
    %v227 = vadd.f32 %v225, %v226
    %v230 = vsel %vm143, %v227, %v220
    %v232 = vadd.s32 %v134, 4294967264
    %v233 = vlaneseq
    %v234 = vshrl.u32 %v233, 7
    %v235 = vsub.s32 %v232, %v234
    %v236 = vrot.slane %v205, %v235
    %v237 = vlaneseq
    %v238 = vshrl.u32 %v237, 7
    %v239 = vsub.s32 %v232, %v238
    %v240 = vrot.slane %v210, %v239
    %v241 = vsel %vm143, %v240, %v236
    %v243 = vsel %vm31, %v230, %v241
    %vm244 = vcmask 326656
    %v245 = vsel %vm244, %v243, 0.0
    %246 = vst [vmem:[#allocation2] sm:$0x3] %v245
    // Predicated region
    $region18: #{tpu_custom_call.1} parent=1 // pred_check
      _
    $region19: #{tpu_custom_call.1} parent=1 // pred_check_branch
      %248 = sbr.rel (0) target = $region21
    $region20: #{tpu_custom_call.1} parent=1 // pred_region
      %s250 = ssub.s32 32, 32
      %251 = vsyncadd [#allocation3], %s250
      %s253 = sshll.u32 [#allocation2], 4
      %s254 = int_to_ptr.vmem [resolvable:$true] %s253
      %256 = dma.vmem_to_hbm [thread:$0]  %s254, 32, %s4, [#allocation3]
    $region21: #{tpu_custom_call.1} parent=1 // pred_fallthru
      _
    // Predicated region
    $region22: #{tpu_custom_call.1} parent=1 // pred_check
      _
    $region23: #{tpu_custom_call.1} parent=1 // pred_check_branch
      %258 = sbr.rel (0) target = $region25
    $region24: #{tpu_custom_call.1} parent=1 // pred_region
      %259 = dma.done [#allocation3], 32
    $region25: #{tpu_custom_call.1} parent=1 // pred_fallthru
      _
    %260 = vsyncpa [#allocation3], 1

</llo_original>
